<compile_context>
chip_gen: v7x
topology: tpu7x:2x2x1
jax: 0.10.0
libtpu: 0.0.40
codegen_flags: <defaults>
</compile_context>

<pallas_src>
import functools
from typing import List

import jax
import jax.numpy as jnp
from jax.experimental import pallas as pl
from jax.experimental.pallas import tpu as pltpu

_LANE = 128
_TARGET_BLOCK_BYTES = 8 * 1024 * 1024    # per VMEM buffer (2 in + 2 out live)
_VMEM_LIMIT_BYTES = 48 * 1024 * 1024     # < v7x 64 MiB physical; ample on v5e/v6e
_MIN_SPLIT_BYTES = 4 * 1024 * 1024       # split 1-step grids bigger than this (v7x megacore)


def _relu_kernel(x_ref, o_ref):
    # Elementwise max(x, 0) on the VPU for the current VMEM tile.
    o_ref[...] = jnp.maximum(x_ref[...], 0)


def _round_up(n: int, m: int) -> int:
    return ((n + m - 1) // m) * m


def _sublane(dtype) -> int:
    # f32 -> 8, bf16/f16 -> 16, int8/fp8 -> 32 (packed-tile minimum).
    return max(8, 32 // jnp.dtype(dtype).itemsize)


@functools.lru_cache(maxsize=None)
def _build_relu(shape, dtype_name, donate):
    """Compile (and cache) a ReLU pallas_call for one array shape/dtype (ndim >= 2)."""
    dtype = jnp.dtype(dtype_name)
    itemsize = dtype.itemsize
    sub = _sublane(dtype)
    ndim = len(shape)
    lead = shape[0]

    # VMEM footprint of a single leading-index slice (lanes pad to 128,
    # second-minor pads to the dtype's sublane multiple).
    padded_lane = _round_up(shape[-1], _LANE)
    if ndim == 2:
        per_lead = padded_lane * itemsize            # one sublane row per leading index
        min_lead = sub                               # dim 0 is the sublane dim -> keep aligned
    else:
        inner = 1
        for d in shape[1:-2]:
            inner *= d
        per_lead = inner * _round_up(shape[-2], sub) * padded_lane * itemsize
        min_lead = 1                                 # dim 0 is not a tiled dim for ndim >= 3

    if per_lead * min_lead > _TARGET_BLOCK_BYTES:
        return None                                  # pathological shape; caller falls back

    # Block along the leading dim only: ~_TARGET_BLOCK_BYTES per VMEM buffer.
    bm = max(min_lead, (_TARGET_BLOCK_BYTES // per_lead) // min_lead * min_lead)
    if bm >= lead:
        bm = lead                                    # whole array in one block (always legal)
        # Give v7x's two TensorCores work on mid-sized single-block slabs.
        if lead * per_lead > _MIN_SPLIT_BYTES and lead >= 2 * min_lead:
            half = _round_up((lead + 1) // 2, min_lead)
            if half < lead:
                bm = half

    grid = (pl.cdiv(lead, bm),)
    block_shape = (bm,) + tuple(shape[1:])
    index_map = lambda i: (i,) + (0,) * (ndim - 1)

    fn = pl.pallas_call(
        _relu_kernel,
        out_shape=jax.ShapeDtypeStruct(shape, dtype),
        grid=grid,
        in_specs=[pl.BlockSpec(block_shape, index_map)],
        out_specs=pl.BlockSpec(block_shape, index_map),
        input_output_aliases={0: 0} if donate else {},
        compiler_params=pltpu.CompilerParams(
            dimension_semantics=("parallel",),
            vmem_limit_bytes=_VMEM_LIMIT_BYTES,
        ),
    )
    return jax.jit(fn, donate_argnums=(0,) if donate else ())


def _relu_values(x, inplace: bool = False):
    """ReLU on one block's values array via a single Pallas launch."""
    x = jnp.asarray(x)
    if x.size == 0:
        return x
    orig_shape = x.shape
    if x.ndim < 2:
        x = x.reshape(1, -1)
    fn = _build_relu(tuple(x.shape), x.dtype.name, bool(inplace))
    if fn is None:
        # TODO(synk): a single leading slice exceeds the VMEM block budget
        # (huge trailing dims); fall back to XLA elementwise for this rare shape.
        out = jnp.maximum(x, 0)
    else:
        out = fn(x)
    return out.reshape(orig_shape)


# ---------------------------------------------------------------------------
# Minimal stand-in for the metatensor TensorMap / TensorBlock containers.
# Only the pieces the forward pass touches are modeled (values + metadata).
# ---------------------------------------------------------------------------
class TensorBlock:
    def __init__(self, values, samples, components, properties):
        self.values = values
        self.samples = samples
        self.components = components
        self.properties = properties


class TensorMap:
    def __init__(self, keys, blocks: List[TensorBlock]):
        self.keys = keys
        self._blocks = list(blocks)

    def blocks(self) -> List[TensorBlock]:
        return self._blocks


class ReLU:
    """Pallas-backed equivalent of torch_alchemical.nn.activations.ReLU."""

    def __init__(self, inplace: bool = False):
        # torch.nn.ReLU's only argument.  inplace=True donates each block's
        # buffer so the kernel truly updates it in place (original array is
        # consumed, matching torch's in-place storage reuse).
        self.inplace = bool(inplace)

    def __call__(self, tensormap: TensorMap) -> TensorMap:
        output_blocks: List[TensorBlock] = []
        for block in tensormap.blocks():
            output_blocks.append(
                TensorBlock(
                    values=_relu_values(block.values, inplace=self.inplace),
                    samples=block.samples,
                    components=block.components,
                    properties=block.properties,
                )
            )
        return TensorMap(keys=tensormap.keys, blocks=output_blocks)

    forward = __call__


if __name__ == "__main__":
    key = jax.random.PRNGKey(0)
    k1, k2, k3 = jax.random.split(key, 3)

    # Three synthetic blocks, as a TensorMap would hold (e.g. per angular channel):
    #   block 0: (samples=16, properties=32)             f32
    #   block 1: (samples=8, components=3, properties=32) f32
    #   block 2: (samples=32, properties=64)              bf16 (dtype-aware sublane path)
    v0 = jax.random.normal(k1, (16, 32), dtype=jnp.float32)
    v1 = jax.random.normal(k2, (8, 3, 32), dtype=jnp.float32)
    v2 = jax.random.normal(k3, (32, 64), dtype=jnp.float32).astype(jnp.bfloat16)

    blocks = [
        TensorBlock(v0, samples="s0", components=[], properties="p0"),
        TensorBlock(v1, samples="s1", components=["c"], properties="p1"),
        TensorBlock(v2, samples="s2", components=[], properties="p2"),
    ]
    tmap = TensorMap(keys=["k0", "k1", "k2"], blocks=blocks)

    refs = [jnp.maximum(v, 0) for v in (v0, v1, v2)]

    # Default (non-inplace) path, like torch.nn.ReLU().
    out_map = ReLU()(tmap)
    outs = [jax.block_until_ready(b.values) for b in out_map.blocks()]
    for o, r, v in zip(outs, refs, (v0, v1, v2)):
        assert o.shape == v.shape and o.dtype == v.dtype
        assert jnp.array_equal(o, r)

    # In-place path: donated buffers, true single read + single write per element.
    copies = [jnp.copy(v) for v in (v0, v1, v2)]
    tmap_ip = TensorMap(
        keys=["k0", "k1", "k2"],
        blocks=[TensorBlock(c, samples="s", components=[], properties="p") for c in copies],
    )
    out_ip = ReLU(inplace=True)(tmap_ip)
    outs_ip = [jax.block_until_ready(b.values) for b in out_ip.blocks()]
    for o, r in zip(outs_ip, refs):
        assert jnp.array_equal(o, r)

    print("KERNEL_OK")
</pallas_src>

<mosaic_0001>
module attributes {stable_mosaic.version = 11 : i64} {
  func.func @_relu_kernel(%arg0: i32, %arg1: memref<16x32xf32, #tpu.memory_space<vmem>>, %arg2: memref<16x32xf32, #tpu.memory_space<vmem>>) attributes {dimension_semantics = [#tpu.dimension_semantics<parallel>], iteration_bounds = array<i64: 1>, scalar_prefetch = 0 : i64, scratch_operands = 0 : i64, tpu.core_type = #tpu.core_type<tc>, window_params = [{transform_indices = @transform_0, window_bounds = array<i64: 16, 32>}, {transform_indices = @transform_1, window_bounds = array<i64: 16, 32>}]} {
    %c0 = arith.constant 0 : index
    %c0_0 = arith.constant 0 : index
    %0 = vector.load %arg1[%c0, %c0_0] : memref<16x32xf32, #tpu.memory_space<vmem>>, vector<16x32xf32>
    %cst = arith.constant 0.000000e+00 : f32
    %1 = vector.broadcast %cst : f32 to vector<16x32xf32>
    %2 = arith.maximumf %0, %1 : vector<16x32xf32>
    %c0_1 = arith.constant 0 : index
    %c0_2 = arith.constant 0 : index
    %3 = vector.load %arg2[%c0_1, %c0_2] : memref<16x32xf32, #tpu.memory_space<vmem>>, vector<16x32xf32>
    tpu.vector_store %arg2[%c0_1, %c0_2], %2 {strides = array<i32>} : memref<16x32xf32, #tpu.memory_space<vmem>>, vector<16x32xf32>,
    return
  }
  func.func @transform_0(%arg0: i32) -> (i32, i32) {
    %c0_i32 = arith.constant 0 : i32
    %c0_i32_0 = arith.constant 0 : i32
    return %arg0, %c0_i32 : i32, i32
  }
  func.func @transform_1(%arg0: i32) -> (i32, i32) {
    %c0_i32 = arith.constant 0 : i32
    %c0_i32_0 = arith.constant 0 : i32
    return %arg0, %c0_i32 : i32, i32
  }
}

</mosaic_0001>

<llo_original>
// kernel: tpu_custom_call.1
$region0: #{tpu_custom_call.1}
  #allocation0 [shape = 'u32[]', space=smem, size = 0x4, offset = 0x4, fixed_abs, tag = 'smem constant byte address 0x4 - core index']
  #allocation1 [shape = 'u32[144,128]{1,0:T(1,128)}', space=vmem, size = 0x12000, scoped, tag = 'internal scratch']
  %s0 = inlined_call_operand.hbm [shape: f32[16,32], index: 0, kind: input, shape index: {}]
  %s1 = inlined_call_operand.hbm [shape: f32[16,32], index: 1, kind: output, shape index: {}]
  %s2 = sld [smem:[#allocation0]]
  $region18: #{tpu_custom_call.1} parent=0
    _
  %s4 = ssub.s32 1, %s2
  %s5 = scalar_select 0, %s4, %s2
  $region1: #{tpu_custom_call.1} parent=0
    #allocation2 [shape = 'u8[8192]{0}', space=vmem, size = 0x2000, scoped, tag = 'input window, operand 0, single buffered']
    #allocation3 [shape = 's32[1]{0}', space=sflag, size = 0x4, scoped, tag = 'scoped memory for tpu_custom_call.1']
    #allocation4 [shape = 's32[1]{0}', space=sflag, size = 0x4, scoped, tag = 'scoped memory for tpu_custom_call.1']
    #allocation5 [shape = 'u8[8192]{0}', space=vmem, size = 0x2000, scoped, tag = 'output window, operand 0, single buffered']
    %6 = vsyncpa [#allocation3], 0
    %7 = vsyncpa [#allocation4], 0
    // Predicated region
    $region2: #{tpu_custom_call.1} parent=1 // pred_check
      _
    $region3: #{tpu_custom_call.1} parent=1 // pred_check_branch
      %9 = sbr.rel (0) target = $region5
    $region4: #{tpu_custom_call.1} parent=1 // pred_region
      %s11 = ssub.s32 256, 256
      %12 = vsyncadd [#allocation3], %s11
      %s13 = sshll.u32 [#allocation2], 4
      %s14 = int_to_ptr.vmem [resolvable:$true] %s13
      %19 = dma.hbm_to_vmem [thread:$0]  %s0, 256, %s14, [#allocation3], 128, 128, 8
    $region5: #{tpu_custom_call.1} parent=1 // pred_fallthru
      _
    // Predicated region
    $region6: #{tpu_custom_call.1} parent=1 // pred_check
      _
    $region7: #{tpu_custom_call.1} parent=1 // pred_check_branch
      %21 = sbr.rel (0) target = $region9
    $region8: #{tpu_custom_call.1} parent=1 // pred_region
      %22 = dma.done [#allocation3], 256
    $region9: #{tpu_custom_call.1} parent=1 // pred_fallthru
      _
    %v23 = vld [vmem:[#allocation2] sm:$0xff]
    %v24 = vld [vmem:[#allocation2 + $0x8] sm:$0xff]
    %v25 = vmax.f32 %v23, 0.0
    %v26 = vmax.f32 %v24, 0.0
    %vm27 = vcmask 261120
    %28 = vst.msk [vmem:[#allocation5] sm:$0xff] %vm27, %v25
    %29 = vst.msk [vmem:[#allocation5 + $0x8] sm:$0xff] %vm27, %v26
    // Predicated region
    $region10: #{tpu_custom_call.1} parent=1 // pred_check
      _
    $region11: #{tpu_custom_call.1} parent=1 // pred_check_branch
      %31 = sbr.rel (0) target = $region13
    $region12: #{tpu_custom_call.1} parent=1 // pred_region
      %s33 = ssub.s32 256, 256
      %34 = vsyncadd [#allocation4], %s33
      %s35 = sshll.u32 [#allocation5], 4
      %s36 = int_to_ptr.vmem [resolvable:$true] %s35
      %41 = dma.vmem_to_hbm [thread:$0]  %s36, 256, %s1, [#allocation4], 128, 128, 8
    $region13: #{tpu_custom_call.1} parent=1 // pred_fallthru
      _
    // Predicated region
    $region14: #{tpu_custom_call.1} parent=1 // pred_check
      _
    $region15: #{tpu_custom_call.1} parent=1 // pred_check_branch
      %43 = sbr.rel (0) target = $region17
    $region16: #{tpu_custom_call.1} parent=1 // pred_region
      %44 = dma.done [#allocation4], 256
    $region17: #{tpu_custom_call.1} parent=1 // pred_fallthru
      _
    %45 = vsyncpa [#allocation3], 1
    %46 = vsyncpa [#allocation4], 1

</llo_original>
